<compile_context>
chip_gen: v7x
topology: tpu7x:2x2x1
jax: 0.10.0
libtpu: 0.0.40
codegen_flags: <defaults>
</compile_context>

<pallas_src>
import functools

import jax
import jax.numpy as jnp
from jax.experimental import pallas as pl
from jax.experimental.pallas import tpu as pltpu

LANE = 128
SUBLANE = 8
EPS = 1e-5


def _round_up(v, m):
    return (v + m - 1) // m * m


def _vmem_budget_bytes():
    """~3/4 of physical VMEM (48 MiB on v7x, 96 MiB on v5e/v6e) so the
    compiler keeps headroom for internal scratch / semaphores."""
    phys = 64 << 20  # conservative default (v7x per-core VMEM)
    try:
        info = pltpu.get_tpu_info()
        phys = int(getattr(info, "vmem_capacity_bytes", phys))
    except Exception:
        pass
    return max((phys * 3) // 4, 16 << 20)


def _pick_tile_n(n, d_max_p, budget):
    """Largest batch tile (<=512, multiple of 8) whose double-buffered bf16
    activation tiles + resident bf16 weight + f32 temporaries fit the budget."""
    tile = 512
    while tile > SUBLANE:
        need = (2 * tile * d_max_p * 2 * 2      # in+out bf16 tiles, double-buffered
                + 2 * d_max_p * d_max_p * 2     # bf16 weight (double-buffered bound)
                + 4 * tile * d_max_p * 4)       # f32 compute temporaries
        if need <= budget:
            break
        tile //= 2
    return max(SUBLANE, min(tile, _round_up(n, SUBLANE)))


def _vmem_limit(tile_n, d_in_p, d_out_p, budget):
    d_max = max(d_in_p, d_out_p)
    need = (2 * tile_n * d_in_p * 2            # double-buffered bf16 input tiles
            + 2 * tile_n * d_out_p * 4         # double-buffered output tiles (f32 bound)
            + 2 * d_in_p * d_out_p * 2         # bf16 weight
            + 12 * SUBLANE * d_max * 4         # stats / gamma / beta / bias vectors
            + 3 * tile_n * d_max * 4)          # f32 temporaries
    return int(min(max(2 * need, 4 << 20), budget))


def _apply_activation(h, activation):
    if activation == "relu":
        return jnp.maximum(h, 0.0)
    if activation == "sigmoid":
        return jax.nn.sigmoid(h)
    return h  # matches the PyTorch 'else' branch (no activation)


def _fold_bn(psum_ref, pssq_ref, gamma_ref, beta_ref, inv_n, eps):
    """Fold training-mode BatchNorm1d (biased variance) of the previous layer
    into a single (scale, shift) pair.  rsqrt runs on the EUP slot."""
    mean = jnp.sum(psum_ref[...], axis=0, keepdims=True) * inv_n
    msq = jnp.sum(pssq_ref[...], axis=0, keepdims=True) * inv_n
    var = jnp.maximum(msq - mean * mean, 0.0)
    scale = gamma_ref[...] * jax.lax.rsqrt(var + eps)
    shift = beta_ref[...] - mean * scale
    return scale, shift


# --------------------------------------------------------------------------
# Kernel A (hidden layer): [folded-BN affine + activation] -> Linear (MXU)
#                          -> accumulate this layer's BN sum / sum-of-squares
# --------------------------------------------------------------------------
def _make_hidden_kernel(*, apply_affine, activation, tile_n, n_valid,
                        needs_mask, tiles_per_core, inv_n, eps):
    groups = tile_n // SUBLANE

    def stats_update(t, y, sum_ref, ssq_ref):
        @pl.when(t == 0)
        def _():
            sum_ref[...] = jnp.zeros_like(sum_ref)
            ssq_ref[...] = jnp.zeros_like(ssq_ref)
        # Partial sums per sublane group -> full (8, D) unmasked accumulator.
        sum_ref[...] += jnp.sum(y.reshape(groups, SUBLANE, -1), axis=0)
        ssq_ref[...] += jnp.sum((y * y).reshape(groups, SUBLANE, -1), axis=0)

    if apply_affine:
        def kernel(h_ref, psum_ref, pssq_ref, gamma_ref, beta_ref, w_ref,
                   y_ref, sum_ref, ssq_ref):
            c = pl.program_id(0)
            t = pl.program_id(1)
            scale, shift = _fold_bn(psum_ref, pssq_ref, gamma_ref, beta_ref,
                                    inv_n, eps)
            h = h_ref[...].astype(jnp.float32) * scale + shift
            h = _apply_activation(h, activation)
            if needs_mask:
                # Zero padded batch rows so they pollute neither this layer's
                # output nor its batch statistics (only compiled in when
                # padding actually exists).
                base = (c * tiles_per_core + t) * tile_n
                row = jax.lax.broadcasted_iota(jnp.int32, (tile_n, 1), 0) + base
                h = jnp.where(row < n_valid, h, 0.0)
            y = jnp.dot(h.astype(jnp.bfloat16), w_ref[...],
                        preferred_element_type=jnp.float32)
            y_ref[...] = y.astype(y_ref.dtype)       # bf16 activation writeback
            stats_update(t, y, sum_ref, ssq_ref)
        return kernel

    def kernel(h_ref, w_ref, y_ref, sum_ref, ssq_ref):
        t = pl.program_id(1)
        # First hidden layer: padded batch rows of x are zero, and the Linear
        # bias is skipped because it cancels inside BatchNorm.
        y = jnp.dot(h_ref[...].astype(jnp.bfloat16), w_ref[...],
                    preferred_element_type=jnp.float32)
        y_ref[...] = y.astype(y_ref.dtype)
        stats_update(t, y, sum_ref, ssq_ref)
    return kernel


# --------------------------------------------------------------------------
# Kernel B (final layer): [folded-BN affine + activation] -> Linear + bias
# --------------------------------------------------------------------------
def _make_final_kernel(*, apply_affine, activation, inv_n, eps):
    if apply_affine:
        def kernel(h_ref, psum_ref, pssq_ref, gamma_ref, beta_ref, w_ref,
                   b_ref, out_ref):
            scale, shift = _fold_bn(psum_ref, pssq_ref, gamma_ref, beta_ref,
                                    inv_n, eps)
            h = h_ref[...].astype(jnp.float32) * scale + shift
            h = _apply_activation(h, activation)
            out = jnp.dot(h.astype(jnp.bfloat16), w_ref[...],
                          preferred_element_type=jnp.float32) + b_ref[...]
            out_ref[...] = out.astype(out_ref.dtype)
        return kernel

    def kernel(h_ref, w_ref, b_ref, out_ref):
        out = jnp.dot(h_ref[...].astype(jnp.bfloat16), w_ref[...],
                      preferred_element_type=jnp.float32) + b_ref[...]
        out_ref[...] = out.astype(out_ref.dtype)
    return kernel


# --------------------------------------------------------------------------
# Wrapper
# --------------------------------------------------------------------------
def mlp_pallas(x, params, *, num_layers, activation, eps=EPS):
    """Forward pass of the PyTorch MLP (training-mode BatchNorm1d).

    `params` is the flat tuple from `init_params`: per hidden layer
    (W (in,out) pre-transposed, b (1,out), gamma (1,out), beta (1,out)),
    then (W_last, b_last)."""
    if num_layers < 1:
        raise ValueError("number of layers should be positive!")

    n, d_in = x.shape
    inv_n = 1.0 / n

    # Feature dims per layer (padded to the lane width).
    dims = [d_in]
    k = 0
    for _ in range(num_layers - 1):
        dims.append(params[k].shape[1]); k += 4
    dims.append(params[k].shape[1])
    dims_p = [_round_up(d, LANE) for d in dims]
    d_max_p = max(dims_p)

    budget = _vmem_budget_bytes()
    tile_n = _pick_tile_n(n, d_max_p, budget)
    n_pad = _round_up(n, tile_n)
    num_tiles = n_pad // tile_n
    # Split batch tiles 2-ways for the stats kernels so both v7x TensorCores
    # accumulate partial statistics (harmless serial loop on v5e/v6e).
    split = 2 if (num_tiles >= 2 and num_tiles % 2 == 0) else 1
    tiles_per_core = num_tiles // split
    has_pad_rows = n_pad != n

    def pad_mat_bf16(w, r, c):
        return (jnp.zeros((r, c), jnp.bfloat16)
                .at[:w.shape[0], :w.shape[1]].set(w.astype(jnp.bfloat16)))

    def pad_row_f32(v, c):
        return (jnp.zeros((1, c), jnp.float32)
                .at[:, :v.shape[1]].set(v.astype(jnp.float32)))

    d_cur_p = dims_p[0]
    h = (jnp.zeros((n_pad, d_cur_p), jnp.bfloat16)
         .at[:n, :d_in].set(x.astype(jnp.bfloat16)))

    stats = None          # (sum, ssq) of the previous hidden layer
    gamma_p = beta_p = None
    idx = 0

    # ---- hidden layers ------------------------------------------------------
    for layer in range(num_layers - 1):
        w, _b_unused, gamma, beta = params[idx:idx + 4]   # bias cancels in BN
        idx += 4
        d_out_p = dims_p[layer + 1]
        w_p = pad_mat_bf16(w, d_cur_p, d_out_p)

        apply_affine = stats is not None
        kernel = _make_hidden_kernel(
            apply_affine=apply_affine, activation=activation, tile_n=tile_n,
            n_valid=n, needs_mask=(apply_affine and has_pad_rows),
            tiles_per_core=tiles_per_core, inv_n=inv_n, eps=eps)

        tile_map = lambda c, t: (c * tiles_per_core + t, 0)
        const_map = lambda c, t: (0, 0)

        in_arrays = [h]
        in_specs = [pl.BlockSpec((tile_n, d_cur_p), tile_map)]
        if apply_affine:
            in_arrays += [stats[0], stats[1], gamma_p, beta_p]
            in_specs += [pl.BlockSpec(stats[0].shape, const_map),
                         pl.BlockSpec(stats[1].shape, const_map),
                         pl.BlockSpec((1, d_cur_p), const_map),
                         pl.BlockSpec((1, d_cur_p), const_map)]
        in_arrays.append(w_p)
        in_specs.append(pl.BlockSpec((d_cur_p, d_out_p), const_map))

        flops = int(2 * n_pad * d_cur_p * d_out_p + 8 * n_pad * d_out_p)
        transcend = int(n_pad * d_cur_p) if (apply_affine and activation == "sigmoid") else 0
        bytes_acc = int(n_pad * d_cur_p * 2 + w_p.size * 2 + n_pad * d_out_p * 2
                        + 2 * split * SUBLANE * d_out_p * 4
                        + (4 * d_cur_p * 4 if apply_affine else 0))

        y, s, ssq = pl.pallas_call(
            kernel,
            grid=(split, tiles_per_core),
            in_specs=in_specs,
            out_shape=(jax.ShapeDtypeStruct((n_pad, d_out_p), jnp.bfloat16),
                       jax.ShapeDtypeStruct((split * SUBLANE, d_out_p), jnp.float32),
                       jax.ShapeDtypeStruct((split * SUBLANE, d_out_p), jnp.float32)),
            out_specs=(pl.BlockSpec((tile_n, d_out_p), tile_map),
                       pl.BlockSpec((SUBLANE, d_out_p), lambda c, t: (c, 0)),
                       pl.BlockSpec((SUBLANE, d_out_p), lambda c, t: (c, 0))),
            compiler_params=pltpu.CompilerParams(
                dimension_semantics=("parallel", "arbitrary"),
                vmem_limit_bytes=_vmem_limit(tile_n, d_cur_p, d_out_p, budget)),
            cost_estimate=pl.CostEstimate(flops=flops, transcendentals=transcend,
                                          bytes_accessed=bytes_acc),
        )(*in_arrays)

        stats = (s, ssq)
        gamma_p = pad_row_f32(gamma, d_out_p)
        beta_p = pad_row_f32(beta, d_out_p)
        h = y
        d_cur_p = d_out_p

    # ---- final layer ---------------------------------------------------------
    w, b = params[idx], params[idx + 1]
    d_out = dims[-1]
    d_out_p = dims_p[-1]
    w_p = pad_mat_bf16(w, d_cur_p, d_out_p)
    b_p = pad_row_f32(b, d_out_p)

    apply_affine = stats is not None
    kernel = _make_final_kernel(apply_affine=apply_affine, activation=activation,
                                inv_n=inv_n, eps=eps)

    const1 = lambda i: (0, 0)
    in_arrays = [h]
    in_specs = [pl.BlockSpec((tile_n, d_cur_p), lambda i: (i, 0))]
    if apply_affine:
        in_arrays += [stats[0], stats[1], gamma_p, beta_p]
        in_specs += [pl.BlockSpec(stats[0].shape, const1),
                     pl.BlockSpec(stats[1].shape, const1),
                     pl.BlockSpec((1, d_cur_p), const1),
                     pl.BlockSpec((1, d_cur_p), const1)]
    in_arrays += [w_p, b_p]
    in_specs += [pl.BlockSpec((d_cur_p, d_out_p), const1),
                 pl.BlockSpec((1, d_out_p), const1)]

    flops = int(2 * n_pad * d_cur_p * d_out_p + 4 * n_pad * d_cur_p)
    transcend = int(n_pad * d_cur_p) if (apply_affine and activation == "sigmoid") else 0
    bytes_acc = int(n_pad * d_cur_p * 2 + w_p.size * 2 + n_pad * d_out_p * 4
                    + (4 * d_cur_p * 4 if apply_affine else 0) + d_out_p * 4)

    out = pl.pallas_call(
        kernel,
        grid=(num_tiles,),
        in_specs=in_specs,
        out_shape=jax.ShapeDtypeStruct((n_pad, d_out_p), jnp.float32),
        out_specs=pl.BlockSpec((tile_n, d_out_p), lambda i: (i, 0)),
        compiler_params=pltpu.CompilerParams(
            dimension_semantics=("parallel",),     # independent tiles -> both TCs
            vmem_limit_bytes=_vmem_limit(tile_n, d_cur_p, d_out_p, budget)),
        cost_estimate=pl.CostEstimate(flops=flops, transcendentals=transcend,
                                      bytes_accessed=bytes_acc),
    )(*in_arrays)

    return out[:n, :d_out]


# --------------------------------------------------------------------------
# Parameter init (PyTorch-shape semantics, weights pre-transposed to (in,out))
# --------------------------------------------------------------------------
def init_params(key, num_layers, input_dim, hidden_dim, output_dim):
    dims = [input_dim] + [hidden_dim] * (num_layers - 1) + [output_dim]
    params = []
    for i in range(num_layers):
        key, kw, kb = jax.random.split(key, 3)
        fan_in, fan_out = dims[i], dims[i + 1]
        bound = 1.0 / jnp.sqrt(fan_in)
        w = jax.random.uniform(kw, (fan_in, fan_out), jnp.float32, -bound, bound)
        b = jax.random.uniform(kb, (1, fan_out), jnp.float32, -bound, bound)
        if i < num_layers - 1:
            gamma = jnp.ones((1, fan_out), jnp.float32)   # BatchNorm1d defaults
            beta = jnp.zeros((1, fan_out), jnp.float32)
            params.extend([w, b, gamma, beta])
        else:
            params.extend([w, b])
    return tuple(params)


def mlp_reference(x, params, *, num_layers, activation, eps=EPS):
    """Plain-JAX reference mirroring the PyTorch training-mode forward with
    the same numerics as the kernel (bf16 matmul operands / f32 accumulation,
    bf16 inter-layer storage, biased one-pass variance; the hidden-layer
    Linear bias cancels exactly inside BatchNorm so it is omitted)."""
    def mm(a, w):
        return jnp.dot(a.astype(jnp.bfloat16), w.astype(jnp.bfloat16),
                       preferred_element_type=jnp.float32)

    def act(h):
        if activation == "relu":
            return jnp.maximum(h, 0.0)
        if activation == "sigmoid":
            return jax.nn.sigmoid(h)
        return h

    h = x.astype(jnp.float32)
    idx = 0
    for _ in range(num_layers - 1):
        w, _b, g, be = params[idx:idx + 4]
        idx += 4
        y = mm(h, w)
        mean = y.mean(axis=0, keepdims=True)
        var = jnp.maximum((y * y).mean(axis=0, keepdims=True) - mean * mean, 0.0)
        scale = g * jax.lax.rsqrt(var + eps)
        shift = be - mean * scale
        y16 = y.astype(jnp.bfloat16).astype(jnp.float32)   # bf16 inter-layer storage
        h = act(y16 * scale + shift)
    w, b = params[idx], params[idx + 1]
    return mm(h, w) + b


if __name__ == "__main__":
    num_layers = 3
    input_dim = 16
    hidden_dim = 32
    output_dim = 8
    activation = "relu"
    batch = 10   # not a multiple of the tile -> exercises the padded-row path

    key = jax.random.PRNGKey(0)
    kx, kp = jax.random.split(key)
    x = jax.random.normal(kx, (batch, input_dim), jnp.float32)
    params = init_params(kp, num_layers, input_dim, hidden_dim, output_dim)

    run = jax.jit(functools.partial(
        mlp_pallas, num_layers=num_layers, activation=activation))
    out = jax.block_until_ready(run(x, params))

    ref = mlp_reference(x, params, num_layers=num_layers, activation=activation)
    assert out.shape == (batch, output_dim), out.shape
    err = float(jnp.max(jnp.abs(out - ref)))
    assert jnp.allclose(out, ref, atol=2e-3, rtol=2e-3), f"mismatch, max err {err}"

    # num_layers == 1 path (pure Linear, the `linear_or_not` branch).
    params1 = init_params(kp, 1, input_dim, hidden_dim, output_dim)
    run1 = jax.jit(functools.partial(mlp_pallas, num_layers=1, activation=activation))
    out1 = jax.block_until_ready(run1(x, params1))
    ref1 = mlp_reference(x, params1, num_layers=1, activation=activation)
    assert out1.shape == (batch, output_dim), out1.shape
    assert jnp.allclose(out1, ref1, atol=2e-3, rtol=2e-3), "mismatch (linear path)"

    print("KERNEL_OK")
</pallas_src>

<mosaic_0001>
module attributes {stable_mosaic.version = 11 : i64} {
  func.func @kernel(%arg0: i32, %arg1: i32, %arg2: memref<16x128xbf16, #tpu.memory_space<vmem>>, %arg3: memref<128x128xbf16, #tpu.memory_space<vmem>>, %arg4: memref<16x128xbf16, #tpu.memory_space<vmem>>, %arg5: memref<8x128xf32, #tpu.memory_space<vmem>>, %arg6: memref<8x128xf32, #tpu.memory_space<vmem>>) attributes {dimension_semantics = [#tpu.dimension_semantics<parallel>, #tpu.dimension_semantics<arbitrary>], iteration_bounds = array<i64: 1, 1>, scalar_prefetch = 0 : i64, scratch_operands = 0 : i64, tpu.core_type = #tpu.core_type<tc>, window_params = [{transform_indices = @transform_0, window_bounds = array<i64: 16, 128>}, {pipeline_mode = #tpu.pipeline_mode<synchronous>, transform_indices = @transform_1, window_bounds = array<i64: 128, 128>}, {transform_indices = @transform_2, window_bounds = array<i64: 16, 128>}, {transform_indices = @transform_3, window_bounds = array<i64: 8, 128>}, {transform_indices = @transform_4, window_bounds = array<i64: 8, 128>}]} {
    %c0 = arith.constant 0 : index
    %c0_0 = arith.constant 0 : index
    %0 = vector.load %arg2[%c0, %c0_0] : memref<16x128xbf16, #tpu.memory_space<vmem>>, vector<16x128xbf16>
    %c0_1 = arith.constant 0 : index
    %c0_2 = arith.constant 0 : index
    %1 = vector.load %arg3[%c0_1, %c0_2] : memref<128x128xbf16, #tpu.memory_space<vmem>>, vector<128x128xbf16>
    %cst = arith.constant dense<0.000000e+00> : vector<16x128xf32>
    %2 = tpu.matmul %0, %1, %cst {dimension_numbers = #tpu.dot_dimension_numbers<[1], [0], [0], [1], [0, 0, 1, 1], [], []>} : vector<16x128xbf16>, vector<128x128xbf16>, vector<16x128xf32> -> vector<16x128xf32>
    %3 = arith.truncf %2 : vector<16x128xf32> to vector<16x128xbf16>
    %c0_3 = arith.constant 0 : index
    %c0_4 = arith.constant 0 : index
    %4 = vector.load %arg4[%c0_3, %c0_4] : memref<16x128xbf16, #tpu.memory_space<vmem>>, vector<16x128xbf16>
    tpu.vector_store %arg4[%c0_3, %c0_4], %3 {strides = array<i32>} : memref<16x128xbf16, #tpu.memory_space<vmem>>, vector<16x128xbf16>,
    %c0_i32 = arith.constant 0 : i32
    %5 = arith.cmpi eq, %arg1, %c0_i32 : i32
    %6 = arith.extui %5 : i1 to i32
    %c0_i32_5 = arith.constant 0 : i32
    %7 = arith.cmpi ne, %6, %c0_i32_5 : i32
    scf.if %7 {
      %cst_16 = arith.constant 0.000000e+00 : f32
      %19 = vector.broadcast %cst_16 : f32 to vector<8x128xf32>
      %c0_17 = arith.constant 0 : index
      %c0_18 = arith.constant 0 : index
      %20 = vector.load %arg5[%c0_17, %c0_18] : memref<8x128xf32, #tpu.memory_space<vmem>>, vector<8x128xf32>
      tpu.vector_store %arg5[%c0_17, %c0_18], %19 {strides = array<i32>} : memref<8x128xf32, #tpu.memory_space<vmem>>, vector<8x128xf32>,
      %cst_19 = arith.constant 0.000000e+00 : f32
      %21 = vector.broadcast %cst_19 : f32 to vector<8x128xf32>
      %c0_20 = arith.constant 0 : index
      %c0_21 = arith.constant 0 : index
      %22 = vector.load %arg6[%c0_20, %c0_21] : memref<8x128xf32, #tpu.memory_space<vmem>>, vector<8x128xf32>
      tpu.vector_store %arg6[%c0_20, %c0_21], %21 {strides = array<i32>} : memref<8x128xf32, #tpu.memory_space<vmem>>, vector<8x128xf32>,
    } else {
    }
    %c0_6 = arith.constant 0 : index
    %c0_7 = arith.constant 0 : index
    %8 = vector.load %arg5[%c0_6, %c0_7] : memref<8x128xf32, #tpu.memory_space<vmem>>, vector<8x128xf32>
    %9 = vector.shape_cast %2 : vector<16x128xf32> to vector<2x8x128xf32>
    %cst_8 = arith.constant dense<0.000000e+00> : vector<8x128xf32>
    %10 = vector.multi_reduction <add>, %9, %cst_8 [0] : vector<2x8x128xf32> to vector<8x128xf32>
    %11 = arith.addf %8, %10 : vector<8x128xf32>
    %c0_9 = arith.constant 0 : index
    %c0_10 = arith.constant 0 : index
    %12 = vector.load %arg5[%c0_9, %c0_10] : memref<8x128xf32, #tpu.memory_space<vmem>>, vector<8x128xf32>
    tpu.vector_store %arg5[%c0_9, %c0_10], %11 {strides = array<i32>} : memref<8x128xf32, #tpu.memory_space<vmem>>, vector<8x128xf32>,
    %c0_11 = arith.constant 0 : index
    %c0_12 = arith.constant 0 : index
    %13 = vector.load %arg6[%c0_11, %c0_12] : memref<8x128xf32, #tpu.memory_space<vmem>>, vector<8x128xf32>
    %14 = arith.mulf %2, %2 : vector<16x128xf32>
    %15 = vector.shape_cast %14 : vector<16x128xf32> to vector<2x8x128xf32>
    %cst_13 = arith.constant dense<0.000000e+00> : vector<8x128xf32>
    %16 = vector.multi_reduction <add>, %15, %cst_13 [0] : vector<2x8x128xf32> to vector<8x128xf32>
    %17 = arith.addf %13, %16 : vector<8x128xf32>
    %c0_14 = arith.constant 0 : index
    %c0_15 = arith.constant 0 : index
    %18 = vector.load %arg6[%c0_14, %c0_15] : memref<8x128xf32, #tpu.memory_space<vmem>>, vector<8x128xf32>
    tpu.vector_store %arg6[%c0_14, %c0_15], %17 {strides = array<i32>} : memref<8x128xf32, #tpu.memory_space<vmem>>, vector<8x128xf32>,
    return
  }
  func.func @transform_0(%arg0: i32, %arg1: i32) -> (i32, i32) {
    %c1_i32 = arith.constant 1 : i32
    %0 = arith.muli %arg0, %c1_i32 : i32
    %1 = arith.addi %0, %arg1 : i32
    %c0_i32 = arith.constant 0 : i32
    %c0_i32_0 = arith.constant 0 : i32
    return %1, %c0_i32 : i32, i32
  }
  func.func @transform_1(%arg0: i32, %arg1: i32) -> (i32, i32) {
    %c0_i32 = arith.constant 0 : i32
    %c0_i32_0 = arith.constant 0 : i32
    %c0_i32_1 = arith.constant 0 : i32
    return %c0_i32, %c0_i32_0 : i32, i32
  }
  func.func @transform_2(%arg0: i32, %arg1: i32) -> (i32, i32) {
    %c1_i32 = arith.constant 1 : i32
    %0 = arith.muli %arg0, %c1_i32 : i32
    %1 = arith.addi %0, %arg1 : i32
    %c0_i32 = arith.constant 0 : i32
    %c0_i32_0 = arith.constant 0 : i32
    return %1, %c0_i32 : i32, i32
  }
  func.func @transform_3(%arg0: i32, %arg1: i32) -> (i32, i32) {
    %c0_i32 = arith.constant 0 : i32
    %c0_i32_0 = arith.constant 0 : i32
    return %arg0, %c0_i32 : i32, i32
  }
  func.func @transform_4(%arg0: i32, %arg1: i32) -> (i32, i32) {
    %c0_i32 = arith.constant 0 : i32
    %c0_i32_0 = arith.constant 0 : i32
    return %arg0, %c0_i32 : i32, i32
  }
}

module attributes {stable_mosaic.version = 11 : i64} {
  func.func @kernel(%arg0: i32, %arg1: i32, %arg2: memref<16x128xbf16, #tpu.memory_space<vmem>>, %arg3: memref<8x128xf32, #tpu.memory_space<vmem>>, %arg4: memref<8x128xf32, #tpu.memory_space<vmem>>, %arg5: memref<1x128xf32, #tpu.memory_space<vmem>>, %arg6: memref<1x128xf32, #tpu.memory_space<vmem>>, %arg7: memref<128x128xbf16, #tpu.memory_space<vmem>>, %arg8: memref<16x128xbf16, #tpu.memory_space<vmem>>, %arg9: memref<8x128xf32, #tpu.memory_space<vmem>>, %arg10: memref<8x128xf32, #tpu.memory_space<vmem>>) attributes {dimension_semantics = [#tpu.dimension_semantics<parallel>, #tpu.dimension_semantics<arbitrary>], iteration_bounds = array<i64: 1, 1>, scalar_prefetch = 0 : i64, scratch_operands = 0 : i64, tpu.core_type = #tpu.core_type<tc>, window_params = [{transform_indices = @transform_0, window_bounds = array<i64: 16, 128>}, {pipeline_mode = #tpu.pipeline_mode<synchronous>, transform_indices = @transform_1, window_bounds = array<i64: 8, 128>}, {pipeline_mode = #tpu.pipeline_mode<synchronous>, transform_indices = @transform_2, window_bounds = array<i64: 8, 128>}, {pipeline_mode = #tpu.pipeline_mode<synchronous>, transform_indices = @transform_3, window_bounds = array<i64: 1, 128>}, {pipeline_mode = #tpu.pipeline_mode<synchronous>, transform_indices = @transform_4, window_bounds = array<i64: 1, 128>}, {pipeline_mode = #tpu.pipeline_mode<synchronous>, transform_indices = @transform_5, window_bounds = array<i64: 128, 128>}, {transform_indices = @transform_6, window_bounds = array<i64: 16, 128>}, {transform_indices = @transform_7, window_bounds = array<i64: 8, 128>}, {transform_indices = @transform_8, window_bounds = array<i64: 8, 128>}]} {
    %c0 = arith.constant 0 : index
    %c0_0 = arith.constant 0 : index
    %0 = vector.load %arg3[%c0, %c0_0] : memref<8x128xf32, #tpu.memory_space<vmem>>, vector<8x128xf32>
    %cst = arith.constant dense<0.000000e+00> : vector<128xf32>
    %1 = vector.multi_reduction <add>, %0, %cst [0] : vector<8x128xf32> to vector<128xf32>
    %2 = vector.shape_cast %1 : vector<128xf32> to vector<1x128xf32>
    %cst_1 = arith.constant 1.000000e-01 : f32
    %3 = vector.broadcast %cst_1 : f32 to vector<1x128xf32>
    %4 = arith.mulf %2, %3 : vector<1x128xf32>
    %c0_2 = arith.constant 0 : index
    %c0_3 = arith.constant 0 : index
    %5 = vector.load %arg4[%c0_2, %c0_3] : memref<8x128xf32, #tpu.memory_space<vmem>>, vector<8x128xf32>
    %cst_4 = arith.constant dense<0.000000e+00> : vector<128xf32>
    %6 = vector.multi_reduction <add>, %5, %cst_4 [0] : vector<8x128xf32> to vector<128xf32>
    %7 = vector.shape_cast %6 : vector<128xf32> to vector<1x128xf32>
    %cst_5 = arith.constant 1.000000e-01 : f32
    %8 = vector.broadcast %cst_5 : f32 to vector<1x128xf32>
    %9 = arith.mulf %7, %8 : vector<1x128xf32>
    %10 = arith.mulf %4, %4 : vector<1x128xf32>
    %11 = arith.subf %9, %10 : vector<1x128xf32>
    %cst_6 = arith.constant 0.000000e+00 : f32
    %12 = vector.broadcast %cst_6 : f32 to vector<1x128xf32>
    %13 = arith.maximumf %11, %12 : vector<1x128xf32>
    %c0_7 = arith.constant 0 : index
    %c0_8 = arith.constant 0 : index
    %14 = vector.load %arg5[%c0_7, %c0_8] : memref<1x128xf32, #tpu.memory_space<vmem>>, vector<1x128xf32>
    %cst_9 = arith.constant 9.99999974E-6 : f32
    %15 = vector.broadcast %cst_9 : f32 to vector<1x128xf32>
    %16 = arith.addf %13, %15 : vector<1x128xf32>
    %17 = math.rsqrt %16 : vector<1x128xf32>
    %18 = arith.mulf %14, %17 : vector<1x128xf32>
    %c0_10 = arith.constant 0 : index
    %c0_11 = arith.constant 0 : index
    %19 = vector.load %arg6[%c0_10, %c0_11] : memref<1x128xf32, #tpu.memory_space<vmem>>, vector<1x128xf32>
    %20 = arith.mulf %4, %18 : vector<1x128xf32>
    %21 = arith.subf %19, %20 : vector<1x128xf32>
    %c0_12 = arith.constant 0 : index
    %c0_13 = arith.constant 0 : index
    %22 = vector.load %arg2[%c0_12, %c0_13] : memref<16x128xbf16, #tpu.memory_space<vmem>>, vector<16x128xbf16>
    %23 = arith.extf %22 : vector<16x128xbf16> to vector<16x128xf32>
    %24 = vector.broadcast %18 : vector<1x128xf32> to vector<16x128xf32>
    %25 = arith.mulf %23, %24 : vector<16x128xf32>
    %26 = vector.broadcast %21 : vector<1x128xf32> to vector<16x128xf32>
    %27 = arith.addf %25, %26 : vector<16x128xf32>
    %cst_14 = arith.constant 0.000000e+00 : f32
    %28 = vector.broadcast %cst_14 : f32 to vector<16x128xf32>
    %29 = arith.maximumf %27, %28 : vector<16x128xf32>
    %c1_i32 = arith.constant 1 : i32
    %30 = arith.muli %arg0, %c1_i32 : i32
    %31 = arith.addi %30, %arg1 : i32
    %c16_i32 = arith.constant 16 : i32
    %32 = arith.muli %31, %c16_i32 : i32
    %33 = tpu.iota {dimensions = array<i32: 0>} : vector<16x1xi32>
    %34 = vector.broadcast %32 : i32 to vector<16x1xi32>
    %35 = arith.addi %33, %34 : vector<16x1xi32>
    %c10_i32 = arith.constant 10 : i32
    %36 = vector.broadcast %c10_i32 : i32 to vector<16x1xi32>
    %37 = arith.cmpi slt, %35, %36 : vector<16x1xi32>
    %cst_15 = arith.constant 0.000000e+00 : f32
    %38 = vector.shape_cast %37 : vector<16x1xi1> to vector<16x1xi1>
    %39 = vector.broadcast %38 : vector<16x1xi1> to vector<16x128xi1>
    %40 = vector.broadcast %cst_15 : f32 to vector<16x128xf32>
    %41 = arith.select %39, %29, %40 : vector<16x128xi1>, vector<16x128xf32>
    %42 = arith.truncf %41 : vector<16x128xf32> to vector<16x128xbf16>
    %c0_16 = arith.constant 0 : index
    %c0_17 = arith.constant 0 : index
    %43 = vector.load %arg7[%c0_16, %c0_17] : memref<128x128xbf16, #tpu.memory_space<vmem>>, vector<128x128xbf16>
    %cst_18 = arith.constant dense<0.000000e+00> : vector<16x128xf32>
    %44 = tpu.matmul %42, %43, %cst_18 {dimension_numbers = #tpu.dot_dimension_numbers<[1], [0], [0], [1], [0, 0, 1, 1], [], []>} : vector<16x128xbf16>, vector<128x128xbf16>, vector<16x128xf32> -> vector<16x128xf32>
    %45 = arith.truncf %44 : vector<16x128xf32> to vector<16x128xbf16>
    %c0_19 = arith.constant 0 : index
    %c0_20 = arith.constant 0 : index
    %46 = vector.load %arg8[%c0_19, %c0_20] : memref<16x128xbf16, #tpu.memory_space<vmem>>, vector<16x128xbf16>
    tpu.vector_store %arg8[%c0_19, %c0_20], %45 {strides = array<i32>} : memref<16x128xbf16, #tpu.memory_space<vmem>>, vector<16x128xbf16>,
    %c0_i32 = arith.constant 0 : i32
    %47 = arith.cmpi eq, %arg1, %c0_i32 : i32
    %48 = arith.extui %47 : i1 to i32
    %c0_i32_21 = arith.constant 0 : i32
    %49 = arith.cmpi ne, %48, %c0_i32_21 : i32
    scf.if %49 {
      %cst_32 = arith.constant 0.000000e+00 : f32
      %61 = vector.broadcast %cst_32 : f32 to vector<8x128xf32>
      %c0_33 = arith.constant 0 : index
      %c0_34 = arith.constant 0 : index
      %62 = vector.load %arg9[%c0_33, %c0_34] : memref<8x128xf32, #tpu.memory_space<vmem>>, vector<8x128xf32>
      tpu.vector_store %arg9[%c0_33, %c0_34], %61 {strides = array<i32>} : memref<8x128xf32, #tpu.memory_space<vmem>>, vector<8x128xf32>,
      %cst_35 = arith.constant 0.000000e+00 : f32
      %63 = vector.broadcast %cst_35 : f32 to vector<8x128xf32>
      %c0_36 = arith.constant 0 : index
      %c0_37 = arith.constant 0 : index
      %64 = vector.load %arg10[%c0_36, %c0_37] : memref<8x128xf32, #tpu.memory_space<vmem>>, vector<8x128xf32>
      tpu.vector_store %arg10[%c0_36, %c0_37], %63 {strides = array<i32>} : memref<8x128xf32, #tpu.memory_space<vmem>>, vector<8x128xf32>,
    } else {
    }
    %c0_22 = arith.constant 0 : index
    %c0_23 = arith.constant 0 : index
    %50 = vector.load %arg9[%c0_22, %c0_23] : memref<8x128xf32, #tpu.memory_space<vmem>>, vector<8x128xf32>
    %51 = vector.shape_cast %44 : vector<16x128xf32> to vector<2x8x128xf32>
    %cst_24 = arith.constant dense<0.000000e+00> : vector<8x128xf32>
    %52 = vector.multi_reduction <add>, %51, %cst_24 [0] : vector<2x8x128xf32> to vector<8x128xf32>
    %53 = arith.addf %50, %52 : vector<8x128xf32>
    %c0_25 = arith.constant 0 : index
    %c0_26 = arith.constant 0 : index
    %54 = vector.load %arg9[%c0_25, %c0_26] : memref<8x128xf32, #tpu.memory_space<vmem>>, vector<8x128xf32>
    tpu.vector_store %arg9[%c0_25, %c0_26], %53 {strides = array<i32>} : memref<8x128xf32, #tpu.memory_space<vmem>>, vector<8x128xf32>,
    %c0_27 = arith.constant 0 : index
    %c0_28 = arith.constant 0 : index
    %55 = vector.load %arg10[%c0_27, %c0_28] : memref<8x128xf32, #tpu.memory_space<vmem>>, vector<8x128xf32>
    %56 = arith.mulf %44, %44 : vector<16x128xf32>
    %57 = vector.shape_cast %56 : vector<16x128xf32> to vector<2x8x128xf32>
    %cst_29 = arith.constant dense<0.000000e+00> : vector<8x128xf32>
    %58 = vector.multi_reduction <add>, %57, %cst_29 [0] : vector<2x8x128xf32> to vector<8x128xf32>
    %59 = arith.addf %55, %58 : vector<8x128xf32>
    %c0_30 = arith.constant 0 : index
    %c0_31 = arith.constant 0 : index
    %60 = vector.load %arg10[%c0_30, %c0_31] : memref<8x128xf32, #tpu.memory_space<vmem>>, vector<8x128xf32>
    tpu.vector_store %arg10[%c0_30, %c0_31], %59 {strides = array<i32>} : memref<8x128xf32, #tpu.memory_space<vmem>>, vector<8x128xf32>,
    return
  }
  func.func @transform_0(%arg0: i32, %arg1: i32) -> (i32, i32) {
    %c1_i32 = arith.constant 1 : i32
    %0 = arith.muli %arg0, %c1_i32 : i32
    %1 = arith.addi %0, %arg1 : i32
    %c0_i32 = arith.constant 0 : i32
    %c0_i32_0 = arith.constant 0 : i32
    return %1, %c0_i32 : i32, i32
  }
  func.func @transform_1(%arg0: i32, %arg1: i32) -> (i32, i32) {
    %c0_i32 = arith.constant 0 : i32
    %c0_i32_0 = arith.constant 0 : i32
    %c0_i32_1 = arith.constant 0 : i32
    return %c0_i32, %c0_i32_0 : i32, i32
  }
  func.func @transform_2(%arg0: i32, %arg1: i32) -> (i32, i32) {
    %c0_i32 = arith.constant 0 : i32
    %c0_i32_0 = arith.constant 0 : i32
    %c0_i32_1 = arith.constant 0 : i32
    return %c0_i32, %c0_i32_0 : i32, i32
  }
  func.func @transform_3(%arg0: i32, %arg1: i32) -> (i32, i32) {
    %c0_i32 = arith.constant 0 : i32
    %c0_i32_0 = arith.constant 0 : i32
    %c0_i32_1 = arith.constant 0 : i32
    return %c0_i32, %c0_i32_0 : i32, i32
  }
  func.func @transform_4(%arg0: i32, %arg1: i32) -> (i32, i32) {
    %c0_i32 = arith.constant 0 : i32
    %c0_i32_0 = arith.constant 0 : i32
    %c0_i32_1 = arith.constant 0 : i32
    return %c0_i32, %c0_i32_0 : i32, i32
  }
  func.func @transform_5(%arg0: i32, %arg1: i32) -> (i32, i32) {
    %c0_i32 = arith.constant 0 : i32
    %c0_i32_0 = arith.constant 0 : i32
    %c0_i32_1 = arith.constant 0 : i32
    return %c0_i32, %c0_i32_0 : i32, i32
  }
  func.func @transform_6(%arg0: i32, %arg1: i32) -> (i32, i32) {
    %c1_i32 = arith.constant 1 : i32
    %0 = arith.muli %arg0, %c1_i32 : i32
    %1 = arith.addi %0, %arg1 : i32
    %c0_i32 = arith.constant 0 : i32
    %c0_i32_0 = arith.constant 0 : i32
    return %1, %c0_i32 : i32, i32
  }
  func.func @transform_7(%arg0: i32, %arg1: i32) -> (i32, i32) {
    %c0_i32 = arith.constant 0 : i32
    %c0_i32_0 = arith.constant 0 : i32
    return %arg0, %c0_i32 : i32, i32
  }
  func.func @transform_8(%arg0: i32, %arg1: i32) -> (i32, i32) {
    %c0_i32 = arith.constant 0 : i32
    %c0_i32_0 = arith.constant 0 : i32
    return %arg0, %c0_i32 : i32, i32
  }
}

module attributes {stable_mosaic.version = 11 : i64} {
  func.func @kernel(%arg0: i32, %arg1: memref<16x128xbf16, #tpu.memory_space<vmem>>, %arg2: memref<8x128xf32, #tpu.memory_space<vmem>>, %arg3: memref<8x128xf32, #tpu.memory_space<vmem>>, %arg4: memref<1x128xf32, #tpu.memory_space<vmem>>, %arg5: memref<1x128xf32, #tpu.memory_space<vmem>>, %arg6: memref<128x128xbf16, #tpu.memory_space<vmem>>, %arg7: memref<1x128xf32, #tpu.memory_space<vmem>>, %arg8: memref<16x128xf32, #tpu.memory_space<vmem>>) attributes {dimension_semantics = [#tpu.dimension_semantics<parallel>], iteration_bounds = array<i64: 1>, scalar_prefetch = 0 : i64, scratch_operands = 0 : i64, tpu.core_type = #tpu.core_type<tc>, window_params = [{transform_indices = @transform_0, window_bounds = array<i64: 16, 128>}, {pipeline_mode = #tpu.pipeline_mode<synchronous>, transform_indices = @transform_1, window_bounds = array<i64: 8, 128>}, {pipeline_mode = #tpu.pipeline_mode<synchronous>, transform_indices = @transform_2, window_bounds = array<i64: 8, 128>}, {pipeline_mode = #tpu.pipeline_mode<synchronous>, transform_indices = @transform_3, window_bounds = array<i64: 1, 128>}, {pipeline_mode = #tpu.pipeline_mode<synchronous>, transform_indices = @transform_4, window_bounds = array<i64: 1, 128>}, {pipeline_mode = #tpu.pipeline_mode<synchronous>, transform_indices = @transform_5, window_bounds = array<i64: 128, 128>}, {pipeline_mode = #tpu.pipeline_mode<synchronous>, transform_indices = @transform_6, window_bounds = array<i64: 1, 128>}, {transform_indices = @transform_7, window_bounds = array<i64: 16, 128>}]} {
    %c0 = arith.constant 0 : index
    %c0_0 = arith.constant 0 : index
    %0 = vector.load %arg2[%c0, %c0_0] : memref<8x128xf32, #tpu.memory_space<vmem>>, vector<8x128xf32>
    %cst = arith.constant dense<0.000000e+00> : vector<128xf32>
    %1 = vector.multi_reduction <add>, %0, %cst [0] : vector<8x128xf32> to vector<128xf32>
    %2 = vector.shape_cast %1 : vector<128xf32> to vector<1x128xf32>
    %cst_1 = arith.constant 1.000000e-01 : f32
    %3 = vector.broadcast %cst_1 : f32 to vector<1x128xf32>
    %4 = arith.mulf %2, %3 : vector<1x128xf32>
    %c0_2 = arith.constant 0 : index
    %c0_3 = arith.constant 0 : index
    %5 = vector.load %arg3[%c0_2, %c0_3] : memref<8x128xf32, #tpu.memory_space<vmem>>, vector<8x128xf32>
    %cst_4 = arith.constant dense<0.000000e+00> : vector<128xf32>
    %6 = vector.multi_reduction <add>, %5, %cst_4 [0] : vector<8x128xf32> to vector<128xf32>
    %7 = vector.shape_cast %6 : vector<128xf32> to vector<1x128xf32>
    %cst_5 = arith.constant 1.000000e-01 : f32
    %8 = vector.broadcast %cst_5 : f32 to vector<1x128xf32>
    %9 = arith.mulf %7, %8 : vector<1x128xf32>
    %10 = arith.mulf %4, %4 : vector<1x128xf32>
    %11 = arith.subf %9, %10 : vector<1x128xf32>
    %cst_6 = arith.constant 0.000000e+00 : f32
    %12 = vector.broadcast %cst_6 : f32 to vector<1x128xf32>
    %13 = arith.maximumf %11, %12 : vector<1x128xf32>
    %c0_7 = arith.constant 0 : index
    %c0_8 = arith.constant 0 : index
    %14 = vector.load %arg4[%c0_7, %c0_8] : memref<1x128xf32, #tpu.memory_space<vmem>>, vector<1x128xf32>
    %cst_9 = arith.constant 9.99999974E-6 : f32
    %15 = vector.broadcast %cst_9 : f32 to vector<1x128xf32>
    %16 = arith.addf %13, %15 : vector<1x128xf32>
    %17 = math.rsqrt %16 : vector<1x128xf32>
    %18 = arith.mulf %14, %17 : vector<1x128xf32>
    %c0_10 = arith.constant 0 : index
    %c0_11 = arith.constant 0 : index
    %19 = vector.load %arg5[%c0_10, %c0_11] : memref<1x128xf32, #tpu.memory_space<vmem>>, vector<1x128xf32>
    %20 = arith.mulf %4, %18 : vector<1x128xf32>
    %21 = arith.subf %19, %20 : vector<1x128xf32>
    %c0_12 = arith.constant 0 : index
    %c0_13 = arith.constant 0 : index
    %22 = vector.load %arg1[%c0_12, %c0_13] : memref<16x128xbf16, #tpu.memory_space<vmem>>, vector<16x128xbf16>
    %23 = arith.extf %22 : vector<16x128xbf16> to vector<16x128xf32>
    %24 = vector.broadcast %18 : vector<1x128xf32> to vector<16x128xf32>
    %25 = arith.mulf %23, %24 : vector<16x128xf32>
    %26 = vector.broadcast %21 : vector<1x128xf32> to vector<16x128xf32>
    %27 = arith.addf %25, %26 : vector<16x128xf32>
    %cst_14 = arith.constant 0.000000e+00 : f32
    %28 = vector.broadcast %cst_14 : f32 to vector<16x128xf32>
    %29 = arith.maximumf %27, %28 : vector<16x128xf32>
    %30 = arith.truncf %29 : vector<16x128xf32> to vector<16x128xbf16>
    %c0_15 = arith.constant 0 : index
    %c0_16 = arith.constant 0 : index
    %31 = vector.load %arg6[%c0_15, %c0_16] : memref<128x128xbf16, #tpu.memory_space<vmem>>, vector<128x128xbf16>
    %cst_17 = arith.constant dense<0.000000e+00> : vector<16x128xf32>
    %32 = tpu.matmul %30, %31, %cst_17 {dimension_numbers = #tpu.dot_dimension_numbers<[1], [0], [0], [1], [0, 0, 1, 1], [], []>} : vector<16x128xbf16>, vector<128x128xbf16>, vector<16x128xf32> -> vector<16x128xf32>
    %c0_18 = arith.constant 0 : index
    %c0_19 = arith.constant 0 : index
    %33 = vector.load %arg7[%c0_18, %c0_19] : memref<1x128xf32, #tpu.memory_space<vmem>>, vector<1x128xf32>
    %34 = vector.broadcast %33 : vector<1x128xf32> to vector<16x128xf32>
    %35 = arith.addf %32, %34 : vector<16x128xf32>
    %c0_20 = arith.constant 0 : index
    %c0_21 = arith.constant 0 : index
    %36 = vector.load %arg8[%c0_20, %c0_21] : memref<16x128xf32, #tpu.memory_space<vmem>>, vector<16x128xf32>
    tpu.vector_store %arg8[%c0_20, %c0_21], %35 {strides = array<i32>} : memref<16x128xf32, #tpu.memory_space<vmem>>, vector<16x128xf32>,
    return
  }
  func.func @transform_0(%arg0: i32) -> (i32, i32) {
    %c0_i32 = arith.constant 0 : i32
    %c0_i32_0 = arith.constant 0 : i32
    return %arg0, %c0_i32 : i32, i32
  }
  func.func @transform_1(%arg0: i32) -> (i32, i32) {
    %c0_i32 = arith.constant 0 : i32
    %c0_i32_0 = arith.constant 0 : i32
    %c0_i32_1 = arith.constant 0 : i32
    return %c0_i32, %c0_i32_0 : i32, i32
  }
  func.func @transform_2(%arg0: i32) -> (i32, i32) {
    %c0_i32 = arith.constant 0 : i32
    %c0_i32_0 = arith.constant 0 : i32
    %c0_i32_1 = arith.constant 0 : i32
    return %c0_i32, %c0_i32_0 : i32, i32
  }
  func.func @transform_3(%arg0: i32) -> (i32, i32) {
    %c0_i32 = arith.constant 0 : i32
    %c0_i32_0 = arith.constant 0 : i32
    %c0_i32_1 = arith.constant 0 : i32
    return %c0_i32, %c0_i32_0 : i32, i32
  }
  func.func @transform_4(%arg0: i32) -> (i32, i32) {
    %c0_i32 = arith.constant 0 : i32
    %c0_i32_0 = arith.constant 0 : i32
    %c0_i32_1 = arith.constant 0 : i32
    return %c0_i32, %c0_i32_0 : i32, i32
  }
  func.func @transform_5(%arg0: i32) -> (i32, i32) {
    %c0_i32 = arith.constant 0 : i32
    %c0_i32_0 = arith.constant 0 : i32
    %c0_i32_1 = arith.constant 0 : i32
    return %c0_i32, %c0_i32_0 : i32, i32
  }
  func.func @transform_6(%arg0: i32) -> (i32, i32) {
    %c0_i32 = arith.constant 0 : i32
    %c0_i32_0 = arith.constant 0 : i32
    %c0_i32_1 = arith.constant 0 : i32
    return %c0_i32, %c0_i32_0 : i32, i32
  }
  func.func @transform_7(%arg0: i32) -> (i32, i32) {
    %c0_i32 = arith.constant 0 : i32
    %c0_i32_0 = arith.constant 0 : i32
    return %arg0, %c0_i32 : i32, i32
  }
}

</mosaic_0001>

<llo_original>
// kernel: mlp_pallas.3
$region0: #{mlp_pallas.3}
  #allocation0 [shape = 'u32[]', space=smem, size = 0x4, offset = 0x4, fixed_abs, tag = 'smem constant byte address 0x4 - core index']
  #allocation1 [shape = 'u32[144,128]{1,0:T(1,128)}', space=vmem, size = 0x12000, scoped, tag = 'internal scratch']
  %s0 = inlined_call_operand.vmem [shape: bf16[16,128], index: 0, kind: input, shape index: {}]
  %s1 = inlined_call_operand.vmem [shape: bf16[128,128], index: 1, kind: input, shape index: {}]
  %s2 = inlined_call_operand.vmem [shape: bf16[16,128], index: 2, kind: output, shape index: {0}]
  %s3 = inlined_call_operand.vmem [shape: f32[8,128], index: 3, kind: output, shape index: {1}]
  %s4 = inlined_call_operand.vmem [shape: f32[8,128], index: 4, kind: output, shape index: {2}]
  %5 = xla_tuple %s2, %s3, %s4
  %s6 = sld [smem:[#allocation0]]
  $region38: #{mlp_pallas.3} parent=0
    _
  %s8 = ssub.s32 1, %s6
  %s9 = scalar_select 0, %s8, %s6
  // Predicated region
  $region2: #{mlp_pallas.3} parent=0 // pred_check
    _
  $region3: #{mlp_pallas.3} parent=0 // pred_check_branch
    %11 = sbr.rel (0) target = $region5
  $region4: #{mlp_pallas.3} parent=0 // pred_region
    %s12 = sadd.s32 0, 0
    %s13 = smul.u32 2, %s12
    %p14 = scmp.lt.s32.totalorder %s13, 1
    %s15 = scalar_select %p14, %s13, 1
    %s16 = smul.addr %s15, 4
    %s17 = scalar_lea.vmem %s0, %s16
    %s18 = sadd.s32 0, 0
    %s19 = smul.u32 2, %s18
  $region5: #{mlp_pallas.3} parent=0 // pred_fallthru
    _
  // Predicated region
  $region6: #{mlp_pallas.3} parent=0 // pred_check
    _
  $region7: #{mlp_pallas.3} parent=0 // pred_check_branch
    %21 = sbr.rel (0) target = $region9
  $region8: #{mlp_pallas.3} parent=0 // pred_region
    _
  $region9: #{mlp_pallas.3} parent=0 // pred_fallthru
    _
  %s22 = sadd.s32 0, 0
  %s23 = smul.u32 2, %s22
  %p24 = scmp.lt.s32.totalorder %s23, 1
  %s25 = scalar_select %p24, %s23, 1
  %s26 = smul.addr %s25, 4
  %s27 = scalar_lea.vmem %s0, %s26
  %s28 = sadd.s32 0, 0
  %s29 = smul.u32 2, %s28
  %p30 = scmp.lt.s32.totalorder %s29, 1
  %s31 = scalar_select %p30, %s29, 1
  %s32 = smul.addr %s31, 4
  %s33 = scalar_lea.vmem %s2, %s32
  %s34 = sadd.s32 0, 0
  %s35 = smul.u32 2, %s34
  %p36 = scmp.lt.s32.totalorder %s35, 1
  %s37 = scalar_select %p36, %s35, 1
  %s38 = smul.addr %s37, 4
  %s39 = scalar_lea.vmem %s0, %s38
  %s40 = sadd.s32 0, 0
  %s41 = smul.u32 2, %s40
  %s42 = sadd.s32 0, 0
  %s43 = smul.u32 2, %s42
  %p44 = scmp.lt.s32.totalorder %s43, 1
  %s45 = scalar_select %p44, %s43, 1
  %s46 = smul.addr %s45, 4
  %s47 = scalar_lea.vmem %s2, %s46
  %s48 = sadd.s32 0, 0
  %s49 = smul.u32 2, %s48
  %v51 = vld [vmem:[%s39] sm:$0xf]
  %v52 = vld [vmem:[%s39 + $0x4] sm:$0xf]
  %v53 = vld [vmem:[%s1] sm:$0xf]
  %v54 = vld [vmem:[%s1 + $0x4] sm:$0xf]
  %v55 = vld [vmem:[%s1 + $0x8] sm:$0xf]
  %v56 = vld [vmem:[%s1 + $0xc] sm:$0xf]
  %v57 = vld [vmem:[%s1 + $0x10] sm:$0xf]
  %v58 = vld [vmem:[%s1 + $0x14] sm:$0xf]
  %v59 = vld [vmem:[%s1 + $0x18] sm:$0xf]
  %v60 = vld [vmem:[%s1 + $0x1c] sm:$0xf]
  %v61 = vld [vmem:[%s1 + $0x20] sm:$0xf]
  %v62 = vld [vmem:[%s1 + $0x24] sm:$0xf]
  %v63 = vld [vmem:[%s1 + $0x28] sm:$0xf]
  %v64 = vld [vmem:[%s1 + $0x2c] sm:$0xf]
  %v65 = vld [vmem:[%s1 + $0x30] sm:$0xf]
  %v66 = vld [vmem:[%s1 + $0x34] sm:$0xf]
  %v67 = vld [vmem:[%s1 + $0x38] sm:$0xf]
  %v68 = vld [vmem:[%s1 + $0x3c] sm:$0xf]
  %v71 = vunpack.c.l.b16 %v51
  %v72 = vunpack.c.l.b16 %v52
  %v73 = vpack.c.b16 %v72, %v71
  %v91 = vunpack.c.l.b16 %v53
  %v92 = vunpack.c.l.b16 %v54
  %v93 = vunpack.c.l.b16 %v55
  %v94 = vunpack.c.l.b16 %v56
  %v95 = vunpack.c.l.b16 %v57
  %v96 = vunpack.c.l.b16 %v58
  %v97 = vunpack.c.l.b16 %v59
  %v98 = vunpack.c.l.b16 %v60
  %v99 = vunpack.c.l.b16 %v61
  %v100 = vunpack.c.l.b16 %v62
  %v101 = vunpack.c.l.b16 %v63
  %v102 = vunpack.c.l.b16 %v64
  %v103 = vunpack.c.l.b16 %v65
  %v104 = vunpack.c.l.b16 %v66
  %v105 = vunpack.c.l.b16 %v67
  %v106 = vunpack.c.l.b16 %v68
  %v107 = vpack.c.b16 %v92, %v91
  %v108 = vpack.c.b16 %v94, %v93
  %v109 = vpack.c.b16 %v96, %v95
  %v110 = vpack.c.b16 %v98, %v97
  %v111 = vpack.c.b16 %v100, %v99
  %v112 = vpack.c.b16 %v102, %v101
  %v113 = vpack.c.b16 %v104, %v103
  %v114 = vpack.c.b16 %v106, %v105
  %123 = vmatprep.subr.bf16.mxu0 0
  %124 = vmatpush1.bf16.msra.mxu0 %v107
  %125 = vmatprep.subr.bf16.mxu0 0
  %126 = vmatpush1.bf16.msra.mxu0 %v108
  %127 = vmatprep.subr.bf16.mxu0 0
  %128 = vmatpush1.bf16.msra.mxu0 %v109
  %129 = vmatprep.subr.bf16.mxu0 0
  %130 = vmatpush1.bf16.msra.mxu0 %v110
  %131 = vmatprep.subr.bf16.mxu0 0
  %132 = vmatpush1.bf16.msra.mxu0 %v111
  %133 = vmatprep.subr.bf16.mxu0 0
  %134 = vmatpush1.bf16.msra.mxu0 %v112
  %135 = vmatprep.subr.bf16.mxu0 0
  %136 = vmatpush1.bf16.msra.mxu0 %v113
  %137 = vmatprep.subr.bf16.mxu0 0
  %138 = vmatpush1.bf16.msra.mxu0 %v114
  %139 = vmatprep.subr.bf16.mxu0 0
  %140 = vmatpush1.bf16.msra.mxu0 0
  %141 = vmatprep.subr.bf16.mxu0 0
  %142 = vmatpush1.bf16.msra.mxu0 0
  %143 = vmatprep.subr.bf16.mxu0 0
  %144 = vmatpush1.bf16.msra.mxu0 0
  %145 = vmatprep.subr.bf16.mxu0 0
  %146 = vmatpush1.bf16.msra.mxu0 0
  %147 = vmatprep.subr.bf16.mxu0 0
  %148 = vmatpush1.bf16.msra.mxu0 0
  %149 = vmatprep.subr.bf16.mxu0 0
  %150 = vmatpush1.bf16.msra.mxu0 0
  %151 = vmatprep.subr.bf16.mxu0 0
  %152 = vmatpush1.bf16.msra.mxu0 0
  %153 = vmatprep.subr.bf16.mxu0 0
  %154 = vmatpush1.bf16.msra.mxu0 0
  %155 = vmatprep.mubr.bf16.mxu0 0
  %156 = vmatmul.mubr.bf16.gmra.mrb[0].mxu0 %v73
  %v157 = vpop.f32.mrb[0].mxu0
  %v158 = vadd.f32 0.0, %v157
  %v159 = vpop.f32.mrb[0].mxu0
  %v160 = vpop.f32.mrb[0].mxu0
  %v161 = vadd.f32 0.0, %v160
  %v162 = vpop.f32.mrb[0].mxu0
  %163 = vdwg.mxu0
  %v164 = vpack.c.bf16 %v161, %v158
  %v166 = vunpack.c.l.b16 %v164
  %v167 = vunpack.c.h.b16 %v164
  %v168 = vpack.c.b16 %v166, %v166
  %v169 = vpack.c.b16 %v167, %v167
  %172 = vst [vmem:[%s47] sm:$0xf] %v168
  %173 = vst [vmem:[%s47 + $0x4] sm:$0xf] %v169
  %p174 = scmp.eq.s32.totalorder 0, 0
  // Predicated region
  $region10: #{mlp_pallas.3} parent=0 // pred_check
    %p175 = pneg %p174
  $region11: #{mlp_pallas.3} parent=0 // pred_check_branch
    %177 = sbr.rel (%p175) target = $region13
  $region12: #{mlp_pallas.3} parent=0 // pred_region
    %178 = vst [vmem:[%s3] sm:$0xff] 0.0
    %179 = vst [vmem:[%s4] sm:$0xff] 0.0
  $region13: #{mlp_pallas.3} parent=0 // pred_fallthru
    _
  %v180 = vld [vmem:[%s3] sm:$0xff]
  %v181 = vadd.f32 %v158, %v161
  %v182 = vadd.f32 %v180, %v181
  %183 = vst [vmem:[%s3] sm:$0xff] %v182
  %v184 = vld [vmem:[%s4] sm:$0xff]
  %v185 = vmul.f32 %v158, %v158
  %v186 = vmul.f32 %v161, %v161
  %v187 = vadd.f32 %v185, %v186
  %v188 = vadd.f32 %v184, %v187
  %189 = vst [vmem:[%s4] sm:$0xff] %v188
  %s190 = sadd.s32 0, 0
  %s191 = smul.u32 2, %s190
  %p192 = scmp.lt.s32.totalorder %s191, 1
  %s193 = scalar_select %p192, %s191, 1
  %s194 = smul.addr %s193, 4
  %s195 = scalar_lea.vmem %s2, %s194
  // Predicated region
  $region14: #{mlp_pallas.3} parent=0 // pred_check
    _
  $region15: #{mlp_pallas.3} parent=0 // pred_check_branch
    %197 = sbr.rel (0) target = $region17
  $region16: #{mlp_pallas.3} parent=0 // pred_region
    %s198 = sadd.s32 0, 0
    %s199 = smul.u32 2, %s198
  $region17: #{mlp_pallas.3} parent=0 // pred_fallthru
    _
  // Predicated region
  $region18: #{mlp_pallas.3} parent=0 // pred_check
    _
  $region19: #{mlp_pallas.3} parent=0 // pred_check_branch
    %201 = sbr.rel (0) target = $region21
  $region20: #{mlp_pallas.3} parent=0 // pred_region
    _
  $region21: #{mlp_pallas.3} parent=0 // pred_fallthru
    _
  // Predicated region
  $region22: #{mlp_pallas.3} parent=0 // pred_check
    _
  $region23: #{mlp_pallas.3} parent=0 // pred_check_branch
    %203 = sbr.rel (0) target = $region25
  $region24: #{mlp_pallas.3} parent=0 // pred_region
    _
  $region25: #{mlp_pallas.3} parent=0 // pred_fallthru
    _
  // Predicated region
  $region26: #{mlp_pallas.3} parent=0 // pred_check
    _
  $region27: #{mlp_pallas.3} parent=0 // pred_check_branch
    %205 = sbr.rel (0) target = $region29
  $region28: #{mlp_pallas.3} parent=0 // pred_region
    %s206 = sadd.s32 0, 0
    %s207 = smul.u32 2, %s206
    %p208 = scmp.lt.s32.totalorder %s207, 1
    %s209 = scalar_select %p208, %s207, 1
    %s210 = smul.addr %s209, 4
    %s211 = scalar_lea.vmem %s2, %s210
  $region29: #{mlp_pallas.3} parent=0 // pred_fallthru
    _
  // Predicated region
  $region30: #{mlp_pallas.3} parent=0 // pred_check
    _
  $region31: #{mlp_pallas.3} parent=0 // pred_check_branch
    %213 = sbr.rel (0) target = $region33
  $region32: #{mlp_pallas.3} parent=0 // pred_region
    _
  $region33: #{mlp_pallas.3} parent=0 // pred_fallthru
    _
  // Predicated region
  $region34: #{mlp_pallas.3} parent=0 // pred_check
    _
  $region35: #{mlp_pallas.3} parent=0 // pred_check_branch
    %215 = sbr.rel (0) target = $region37
  $region36: #{mlp_pallas.3} parent=0 // pred_region
    _
  $region37: #{mlp_pallas.3} parent=0 // pred_fallthru
    _

// kernel: mlp_pallas.4
$region0: #{mlp_pallas.4}
  #allocation0 [shape = 'u32[]', space=smem, size = 0x4, offset = 0x4, fixed_abs, tag = 'smem constant byte address 0x4 - core index']
  #allocation1 [shape = 'u32[144,128]{1,0:T(1,128)}', space=vmem, size = 0x12000, scoped, tag = 'internal scratch']
  %s0 = inlined_call_operand.vmem [shape: bf16[16,128], index: 0, kind: input, shape index: {}]
  %s1 = inlined_call_operand.vmem [shape: f32[8,128], index: 1, kind: input, shape index: {}]
  %s2 = inlined_call_operand.vmem [shape: f32[8,128], index: 2, kind: input, shape index: {}]
  %s3 = inlined_call_operand.vmem [shape: f32[1,128], index: 3, kind: input, shape index: {}]
  %s4 = inlined_call_operand.vmem [shape: f32[1,128], index: 4, kind: input, shape index: {}]
  %s5 = inlined_call_operand.vmem [shape: bf16[128,128], index: 5, kind: input, shape index: {}]
  %s6 = inlined_call_operand.vmem [shape: bf16[16,128], index: 6, kind: output, shape index: {0}]
  %s7 = inlined_call_operand.vmem [shape: f32[8,128], index: 7, kind: output, shape index: {1}]
  %s8 = inlined_call_operand.vmem [shape: f32[8,128], index: 8, kind: output, shape index: {2}]
  %9 = xla_tuple %s6, %s7, %s8
  %s10 = sld [smem:[#allocation0]]
  $region54: #{mlp_pallas.4} parent=0
    _
  %s12 = ssub.s32 1, %s10
  %s13 = scalar_select 0, %s12, %s10
  // Predicated region
  $region2: #{mlp_pallas.4} parent=0 // pred_check
    _
  $region3: #{mlp_pallas.4} parent=0 // pred_check_branch
    %15 = sbr.rel (0) target = $region5
  $region4: #{mlp_pallas.4} parent=0 // pred_region
    %s16 = sadd.s32 0, 0
    %s17 = smul.u32 2, %s16
    %p18 = scmp.lt.s32.totalorder %s17, 1
    %s19 = scalar_select %p18, %s17, 1
    %s20 = smul.addr %s19, 4
    %s21 = scalar_lea.vmem %s0, %s20
    %s22 = sadd.s32 0, 0
    %s23 = smul.u32 2, %s22
  $region5: #{mlp_pallas.4} parent=0 // pred_fallthru
    _
  // Predicated region
  $region6: #{mlp_pallas.4} parent=0 // pred_check
    _
  $region7: #{mlp_pallas.4} parent=0 // pred_check_branch
    %25 = sbr.rel (0) target = $region9
  $region8: #{mlp_pallas.4} parent=0 // pred_region
    _
  $region9: #{mlp_pallas.4} parent=0 // pred_fallthru
    _
  // Predicated region
  $region10: #{mlp_pallas.4} parent=0 // pred_check
    _
  $region11: #{mlp_pallas.4} parent=0 // pred_check_branch
    %27 = sbr.rel (0) target = $region13
  $region12: #{mlp_pallas.4} parent=0 // pred_region
    _
  $region13: #{mlp_pallas.4} parent=0 // pred_fallthru
    _
  // Predicated region
  $region14: #{mlp_pallas.4} parent=0 // pred_check
    _
  $region15: #{mlp_pallas.4} parent=0 // pred_check_branch
    %29 = sbr.rel (0) target = $region17
  $region16: #{mlp_pallas.4} parent=0 // pred_region
    _
  $region17: #{mlp_pallas.4} parent=0 // pred_fallthru
    _
  // Predicated region
  $region18: #{mlp_pallas.4} parent=0 // pred_check
    _
  $region19: #{mlp_pallas.4} parent=0 // pred_check_branch
    %31 = sbr.rel (0) target = $region21
  $region20: #{mlp_pallas.4} parent=0 // pred_region
    _
  $region21: #{mlp_pallas.4} parent=0 // pred_fallthru
    _
  // Predicated region
  $region22: #{mlp_pallas.4} parent=0 // pred_check
    _
  $region23: #{mlp_pallas.4} parent=0 // pred_check_branch
    %33 = sbr.rel (0) target = $region25
  $region24: #{mlp_pallas.4} parent=0 // pred_region
    _
  $region25: #{mlp_pallas.4} parent=0 // pred_fallthru
    _
  %s34 = sadd.s32 0, 0
  %s35 = smul.u32 2, %s34
  %p36 = scmp.lt.s32.totalorder %s35, 1
  %s37 = scalar_select %p36, %s35, 1
  %s38 = smul.addr %s37, 4
  %s39 = scalar_lea.vmem %s0, %s38
  %s40 = sadd.s32 0, 0
  %s41 = smul.u32 2, %s40
  %p42 = scmp.lt.s32.totalorder %s41, 1
  %s43 = scalar_select %p42, %s41, 1
  %s44 = smul.addr %s43, 4
  %s45 = scalar_lea.vmem %s6, %s44
  %s46 = sadd.s32 0, 0
  %s47 = smul.u32 2, %s46
  %p48 = scmp.lt.s32.totalorder %s47, 1
  %s49 = scalar_select %p48, %s47, 1
  %s50 = smul.addr %s49, 4
  %s51 = scalar_lea.vmem %s0, %s50
  %s52 = sadd.s32 0, 0
  %s53 = smul.u32 2, %s52
  %s54 = sadd.s32 0, 0
  %s55 = smul.u32 2, %s54
  %p56 = scmp.lt.s32.totalorder %s55, 1
  %s57 = scalar_select %p56, %s55, 1
  %s58 = smul.addr %s57, 4
  %s59 = scalar_lea.vmem %s6, %s58
  %s60 = sadd.s32 0, 0
  %s61 = smul.u32 2, %s60
  %v63 = vld [vmem:[%s1] sm:$0xff]
  %v64 = vrot.slane %v63, 4
  %v65 = vadd.f32 %v63, %v64
  %v66 = vrot.slane %v65, 2
  %v67 = vadd.f32 %v65, %v66
  %v68 = vrot.slane %v67, 1
  %v69 = vadd.f32 %v67, %v68
  %v70 = vmul.f32 %v69, 0.1
  %v71 = vld [vmem:[%s2] sm:$0xff]
  %v72 = vrot.slane %v71, 4
  %v73 = vadd.f32 %v71, %v72
  %v74 = vrot.slane %v73, 2
  %v75 = vadd.f32 %v73, %v74
  %v76 = vrot.slane %v75, 1
  %v77 = vadd.f32 %v75, %v76
  %v78 = vmul.f32 %v77, 0.1
  %v79 = vmul.f32 %v70, %v70
  %v80 = vsub.f32 %v78, %v79
  %v81 = vmax.f32 %v80, 0.0
  %v82 = vld [vmem:[%s3] sm:$0x1]
  %v83 = vadd.f32 %v81, 1e-05
  %v84 = vrsqrt.pop %v83
  %v85 = vmul.f32 %v82, %v84
  %v86 = vld [vmem:[%s4] sm:$0x1]
  %v87 = vmul.f32 %v70, %v85
  %v88 = vsub.f32 %v86, %v87
  %v89 = vld [vmem:[%s51] sm:$0xf]
  %v90 = vld [vmem:[%s51 + $0x4] sm:$0xf]
  %v91 = vunpack.c.l.bf16 %v89
  %v92 = vunpack.c.l.bf16 %v90
  %v94 = vlaneseq
  %v95 = vshrl.u32 %v94, 7
  %v96 = vsub.s32 0, %v95
  %v97 = vrot.slane %v85, %v96
  %v99 = vmul.f32 %v91, %v97
  %v100 = vmul.f32 %v92, %v97
  %v102 = vlaneseq
  %v103 = vshrl.u32 %v102, 7
  %v104 = vsub.s32 0, %v103
  %v105 = vrot.slane %v88, %v104
  %v107 = vadd.f32 %v99, %v105
  %v108 = vadd.f32 %v100, %v105
  %v109 = vmax.f32 %v107, 0.0
  %v110 = vmax.f32 %v108, 0.0
  %s111 = sadd.s32 0, 0
  %s112 = smul.u32 %s111, 16
  %v113 = vlaneseq
  %v114 = vshrl.u32 %v113, 7
  %v115 = vadd.s32 %v114, 8
  %v116 = vstv %s112
  %v117 = vadd.s32 %v114, %v116
  %v118 = vadd.s32 %v115, %v116
  %vm119 = vcmp.lt.s32.totalorder %v117, 10
  %vm120 = vcmp.lt.s32.totalorder %v118, 10
  %v121 = vsel %vm119, 1, 0
  %v122 = vsel %vm120, 1, 0
  %vm123 = vcmp.eq.s32.totalorder %v121, 1
  %vm124 = vcmp.eq.s32.totalorder %v122, 1
  %v125 = vsel %vm123, %v109, 0.0
  %v126 = vsel %vm124, %v110, 0.0
  %v127 = vpack.c.bf16 %v126, %v125
  %v128 = vld [vmem:[%s5] sm:$0xf]
  %v129 = vld [vmem:[%s5 + $0x4] sm:$0xf]
  %v130 = vld [vmem:[%s5 + $0x8] sm:$0xf]
  %v131 = vld [vmem:[%s5 + $0xc] sm:$0xf]
  %v132 = vld [vmem:[%s5 + $0x10] sm:$0xf]
  %v133 = vld [vmem:[%s5 + $0x14] sm:$0xf]
  %v134 = vld [vmem:[%s5 + $0x18] sm:$0xf]
  %v135 = vld [vmem:[%s5 + $0x1c] sm:$0xf]
  %v136 = vld [vmem:[%s5 + $0x20] sm:$0xf]
  %v137 = vld [vmem:[%s5 + $0x24] sm:$0xf]
  %v138 = vld [vmem:[%s5 + $0x28] sm:$0xf]
  %v139 = vld [vmem:[%s5 + $0x2c] sm:$0xf]
  %v140 = vld [vmem:[%s5 + $0x30] sm:$0xf]
  %v141 = vld [vmem:[%s5 + $0x34] sm:$0xf]
  %v142 = vld [vmem:[%s5 + $0x38] sm:$0xf]
  %v143 = vld [vmem:[%s5 + $0x3c] sm:$0xf]
  %v160 = vunpack.c.l.b16 %v128
  %v161 = vunpack.c.l.b16 %v129
  %v162 = vunpack.c.l.b16 %v130
  %v163 = vunpack.c.l.b16 %v131
  %v164 = vunpack.c.l.b16 %v132
  %v165 = vunpack.c.l.b16 %v133
  %v166 = vunpack.c.l.b16 %v134
  %v167 = vunpack.c.l.b16 %v135
  %v168 = vunpack.c.l.b16 %v136
  %v169 = vunpack.c.l.b16 %v137
  %v170 = vunpack.c.l.b16 %v138
  %v171 = vunpack.c.l.b16 %v139
  %v172 = vunpack.c.l.b16 %v140
  %v173 = vunpack.c.l.b16 %v141
  %v174 = vunpack.c.l.b16 %v142
  %v175 = vunpack.c.l.b16 %v143
  %v176 = vpack.c.b16 %v161, %v160
  %v177 = vpack.c.b16 %v163, %v162
  %v178 = vpack.c.b16 %v165, %v164
  %v179 = vpack.c.b16 %v167, %v166
  %v180 = vpack.c.b16 %v169, %v168
  %v181 = vpack.c.b16 %v171, %v170
  %v182 = vpack.c.b16 %v173, %v172
  %v183 = vpack.c.b16 %v175, %v174
  %192 = vmatprep.subr.bf16.mxu0 0
  %193 = vmatpush1.bf16.msra.mxu0 %v176
  %194 = vmatprep.subr.bf16.mxu0 0
  %195 = vmatpush1.bf16.msra.mxu0 %v177
  %196 = vmatprep.subr.bf16.mxu0 0
  %197 = vmatpush1.bf16.msra.mxu0 %v178
  %198 = vmatprep.subr.bf16.mxu0 0
  %199 = vmatpush1.bf16.msra.mxu0 %v179
  %200 = vmatprep.subr.bf16.mxu0 0
  %201 = vmatpush1.bf16.msra.mxu0 %v180
  %202 = vmatprep.subr.bf16.mxu0 0
  %203 = vmatpush1.bf16.msra.mxu0 %v181
  %204 = vmatprep.subr.bf16.mxu0 0
  %205 = vmatpush1.bf16.msra.mxu0 %v182
  %206 = vmatprep.subr.bf16.mxu0 0
  %207 = vmatpush1.bf16.msra.mxu0 %v183
  %208 = vmatprep.subr.bf16.mxu0 0
  %209 = vmatpush1.bf16.msra.mxu0 0
  %210 = vmatprep.subr.bf16.mxu0 0
  %211 = vmatpush1.bf16.msra.mxu0 0
  %212 = vmatprep.subr.bf16.mxu0 0
  %213 = vmatpush1.bf16.msra.mxu0 0
  %214 = vmatprep.subr.bf16.mxu0 0
  %215 = vmatpush1.bf16.msra.mxu0 0
  %216 = vmatprep.subr.bf16.mxu0 0
  %217 = vmatpush1.bf16.msra.mxu0 0
  %218 = vmatprep.subr.bf16.mxu0 0
  %219 = vmatpush1.bf16.msra.mxu0 0
  %220 = vmatprep.subr.bf16.mxu0 0
  %221 = vmatpush1.bf16.msra.mxu0 0
  %222 = vmatprep.subr.bf16.mxu0 0
  %223 = vmatpush1.bf16.msra.mxu0 0
  %224 = vmatprep.mubr.bf16.mxu0 0
  %225 = vmatmul.mubr.bf16.gmra.mrb[0].mxu0 %v127
  %v226 = vpop.f32.mrb[0].mxu0
  %v227 = vadd.f32 0.0, %v226
  %v228 = vpop.f32.mrb[0].mxu0
  %v229 = vpop.f32.mrb[0].mxu0
  %v230 = vadd.f32 0.0, %v229
  %v231 = vpop.f32.mrb[0].mxu0
  %232 = vdwg.mxu0
  %v233 = vpack.c.bf16 %v230, %v227
  %v235 = vunpack.c.l.b16 %v233
  %v236 = vunpack.c.h.b16 %v233
  %v237 = vpack.c.b16 %v235, %v235
  %v238 = vpack.c.b16 %v236, %v236
  %241 = vst [vmem:[%s59] sm:$0xf] %v237
  %242 = vst [vmem:[%s59 + $0x4] sm:$0xf] %v238
  %p243 = scmp.eq.s32.totalorder 0, 0
  // Predicated region
  $region26: #{mlp_pallas.4} parent=0 // pred_check
    %p244 = pneg %p243
  $region27: #{mlp_pallas.4} parent=0 // pred_check_branch
    %246 = sbr.rel (%p244) target = $region29
  $region28: #{mlp_pallas.4} parent=0 // pred_region
    %247 = vst [vmem:[%s7] sm:$0xff] 0.0
    %248 = vst [vmem:[%s8] sm:$0xff] 0.0
  $region29: #{mlp_pallas.4} parent=0 // pred_fallthru
    _
  %v249 = vld [vmem:[%s7] sm:$0xff]
  %v250 = vadd.f32 %v227, %v230
  %v251 = vadd.f32 %v249, %v250
  %252 = vst [vmem:[%s7] sm:$0xff] %v251
  %v253 = vld [vmem:[%s8] sm:$0xff]
  %v254 = vmul.f32 %v227, %v227
  %v255 = vmul.f32 %v230, %v230
  %v256 = vadd.f32 %v254, %v255
  %v257 = vadd.f32 %v253, %v256
  %258 = vst [vmem:[%s8] sm:$0xff] %v257
  %s259 = sadd.s32 0, 0
  %s260 = smul.u32 2, %s259
  %p261 = scmp.lt.s32.totalorder %s260, 1
  %s262 = scalar_select %p261, %s260, 1
  %s263 = smul.addr %s262, 4
  %s264 = scalar_lea.vmem %s6, %s263
  // Predicated region
  $region30: #{mlp_pallas.4} parent=0 // pred_check
    _
  $region31: #{mlp_pallas.4} parent=0 // pred_check_branch
    %266 = sbr.rel (0) target = $region33
  $region32: #{mlp_pallas.4} parent=0 // pred_region
    %s267 = sadd.s32 0, 0
    %s268 = smul.u32 2, %s267
  $region33: #{mlp_pallas.4} parent=0 // pred_fallthru
    _
  // Predicated region
  $region34: #{mlp_pallas.4} parent=0 // pred_check
    _
  $region35: #{mlp_pallas.4} parent=0 // pred_check_branch
    %270 = sbr.rel (0) target = $region37
  $region36: #{mlp_pallas.4} parent=0 // pred_region
    _
  $region37: #{mlp_pallas.4} parent=0 // pred_fallthru
    _
  // Predicated region
  $region38: #{mlp_pallas.4} parent=0 // pred_check
    _
  $region39: #{mlp_pallas.4} parent=0 // pred_check_branch
    %272 = sbr.rel (0) target = $region41
  $region40: #{mlp_pallas.4} parent=0 // pred_region
    _
  $region41: #{mlp_pallas.4} parent=0 // pred_fallthru
    _
  // Predicated region
  $region42: #{mlp_pallas.4} parent=0 // pred_check
    _
  $region43: #{mlp_pallas.4} parent=0 // pred_check_branch
    %274 = sbr.rel (0) target = $region45
  $region44: #{mlp_pallas.4} parent=0 // pred_region
    %s275 = sadd.s32 0, 0
    %s276 = smul.u32 2, %s275
    %p277 = scmp.lt.s32.totalorder %s276, 1
    %s278 = scalar_select %p277, %s276, 1
    %s279 = smul.addr %s278, 4
    %s280 = scalar_lea.vmem %s6, %s279
  $region45: #{mlp_pallas.4} parent=0 // pred_fallthru
    _
  // Predicated region
  $region46: #{mlp_pallas.4} parent=0 // pred_check
    _
  $region47: #{mlp_pallas.4} parent=0 // pred_check_branch
    %282 = sbr.rel (0) target = $region49
  $region48: #{mlp_pallas.4} parent=0 // pred_region
    _
  $region49: #{mlp_pallas.4} parent=0 // pred_fallthru
    _
  // Predicated region
  $region50: #{mlp_pallas.4} parent=0 // pred_check
    _
  $region51: #{mlp_pallas.4} parent=0 // pred_check_branch
    %284 = sbr.rel (0) target = $region53
  $region52: #{mlp_pallas.4} parent=0 // pred_region
    _
  $region53: #{mlp_pallas.4} parent=0 // pred_fallthru
    _

// kernel: mlp_pallas.5
$region0: #{mlp_pallas.5}
  #allocation0 [shape = 'u32[]', space=smem, size = 0x4, offset = 0x4, fixed_abs, tag = 'smem constant byte address 0x4 - core index']
  #allocation1 [shape = 'u32[144,128]{1,0:T(1,128)}', space=vmem, size = 0x12000, scoped, tag = 'internal scratch']
  %s0 = inlined_call_operand.vmem [shape: bf16[16,128], index: 0, kind: input, shape index: {}]
  %s1 = inlined_call_operand.vmem [shape: f32[8,128], index: 1, kind: input, shape index: {}]
  %s2 = inlined_call_operand.vmem [shape: f32[8,128], index: 2, kind: input, shape index: {}]
  %s3 = inlined_call_operand.vmem [shape: f32[1,128], index: 3, kind: input, shape index: {}]
  %s4 = inlined_call_operand.vmem [shape: f32[1,128], index: 4, kind: input, shape index: {}]
  %s5 = inlined_call_operand.vmem [shape: bf16[128,128], index: 5, kind: input, shape index: {}]
  %s6 = inlined_call_operand.vmem [shape: f32[1,128], index: 6, kind: input, shape index: {}]
  %s7 = inlined_call_operand.vmem [shape: f32[16,128], index: 7, kind: output, shape index: {}]
  %s8 = sld [smem:[#allocation0]]
  $region38: #{mlp_pallas.5} parent=0
    _
  %s10 = ssub.s32 1, %s8
  %s11 = scalar_select 0, %s10, %s8
  // Predicated region
  $region2: #{mlp_pallas.5} parent=0 // pred_check
    _
  $region3: #{mlp_pallas.5} parent=0 // pred_check_branch
    %13 = sbr.rel (0) target = $region5
  $region4: #{mlp_pallas.5} parent=0 // pred_region
    _
  $region5: #{mlp_pallas.5} parent=0 // pred_fallthru
    _
  // Predicated region
  $region6: #{mlp_pallas.5} parent=0 // pred_check
    _
  $region7: #{mlp_pallas.5} parent=0 // pred_check_branch
    %15 = sbr.rel (0) target = $region9
  $region8: #{mlp_pallas.5} parent=0 // pred_region
    _
  $region9: #{mlp_pallas.5} parent=0 // pred_fallthru
    _
  // Predicated region
  $region10: #{mlp_pallas.5} parent=0 // pred_check
    _
  $region11: #{mlp_pallas.5} parent=0 // pred_check_branch
    %17 = sbr.rel (0) target = $region13
  $region12: #{mlp_pallas.5} parent=0 // pred_region
    _
  $region13: #{mlp_pallas.5} parent=0 // pred_fallthru
    _
  // Predicated region
  $region14: #{mlp_pallas.5} parent=0 // pred_check
    _
  $region15: #{mlp_pallas.5} parent=0 // pred_check_branch
    %19 = sbr.rel (0) target = $region17
  $region16: #{mlp_pallas.5} parent=0 // pred_region
    _
  $region17: #{mlp_pallas.5} parent=0 // pred_fallthru
    _
  // Predicated region
  $region18: #{mlp_pallas.5} parent=0 // pred_check
    _
  $region19: #{mlp_pallas.5} parent=0 // pred_check_branch
    %21 = sbr.rel (0) target = $region21
  $region20: #{mlp_pallas.5} parent=0 // pred_region
    _
  $region21: #{mlp_pallas.5} parent=0 // pred_fallthru
    _
  // Predicated region
  $region22: #{mlp_pallas.5} parent=0 // pred_check
    _
  $region23: #{mlp_pallas.5} parent=0 // pred_check_branch
    %23 = sbr.rel (0) target = $region25
  $region24: #{mlp_pallas.5} parent=0 // pred_region
    _
  $region25: #{mlp_pallas.5} parent=0 // pred_fallthru
    _
  // Predicated region
  $region26: #{mlp_pallas.5} parent=0 // pred_check
    _
  $region27: #{mlp_pallas.5} parent=0 // pred_check_branch
    %25 = sbr.rel (0) target = $region29
  $region28: #{mlp_pallas.5} parent=0 // pred_region
    _
  $region29: #{mlp_pallas.5} parent=0 // pred_fallthru
    _
  %v27 = vld [vmem:[%s1] sm:$0xff]
  %v28 = vrot.slane %v27, 4
  %v29 = vadd.f32 %v27, %v28
  %v30 = vrot.slane %v29, 2
  %v31 = vadd.f32 %v29, %v30
  %v32 = vrot.slane %v31, 1
  %v33 = vadd.f32 %v31, %v32
  %v34 = vmul.f32 %v33, 0.1
  %v35 = vld [vmem:[%s2] sm:$0xff]
  %v36 = vrot.slane %v35, 4
  %v37 = vadd.f32 %v35, %v36
  %v38 = vrot.slane %v37, 2
  %v39 = vadd.f32 %v37, %v38
  %v40 = vrot.slane %v39, 1
  %v41 = vadd.f32 %v39, %v40
  %v42 = vmul.f32 %v41, 0.1
  %v43 = vmul.f32 %v34, %v34
  %v44 = vsub.f32 %v42, %v43
  %v45 = vmax.f32 %v44, 0.0
  %v46 = vld [vmem:[%s3] sm:$0x1]
  %v47 = vadd.f32 %v45, 1e-05
  %v48 = vrsqrt.pop %v47
  %v49 = vmul.f32 %v46, %v48
  %v50 = vld [vmem:[%s4] sm:$0x1]
  %v51 = vmul.f32 %v34, %v49
  %v52 = vsub.f32 %v50, %v51
  %v53 = vld [vmem:[%s0] sm:$0xf]
  %v54 = vld [vmem:[%s0 + $0x4] sm:$0xf]
  %v55 = vunpack.c.l.bf16 %v53
  %v56 = vunpack.c.l.bf16 %v54
  %v58 = vlaneseq
  %v59 = vshrl.u32 %v58, 7
  %v60 = vsub.s32 0, %v59
  %v61 = vrot.slane %v49, %v60
  %v63 = vmul.f32 %v55, %v61
  %v64 = vmul.f32 %v56, %v61
  %v66 = vlaneseq
  %v67 = vshrl.u32 %v66, 7
  %v68 = vsub.s32 0, %v67
  %v69 = vrot.slane %v52, %v68
  %v71 = vadd.f32 %v63, %v69
  %v72 = vadd.f32 %v64, %v69
  %v73 = vmax.f32 %v71, 0.0
  %v74 = vmax.f32 %v72, 0.0
  %v75 = vpack.c.bf16 %v74, %v73
  %v76 = vld [vmem:[%s5] sm:$0xf]
  %v77 = vld [vmem:[%s5 + $0x4] sm:$0xf]
  %v78 = vld [vmem:[%s5 + $0x8] sm:$0xf]
  %v79 = vld [vmem:[%s5 + $0xc] sm:$0xf]
  %v80 = vld [vmem:[%s5 + $0x10] sm:$0xf]
  %v81 = vld [vmem:[%s5 + $0x14] sm:$0xf]
  %v82 = vld [vmem:[%s5 + $0x18] sm:$0xf]
  %v83 = vld [vmem:[%s5 + $0x1c] sm:$0xf]
  %v84 = vld [vmem:[%s5 + $0x20] sm:$0xf]
  %v85 = vld [vmem:[%s5 + $0x24] sm:$0xf]
  %v86 = vld [vmem:[%s5 + $0x28] sm:$0xf]
  %v87 = vld [vmem:[%s5 + $0x2c] sm:$0xf]
  %v88 = vld [vmem:[%s5 + $0x30] sm:$0xf]
  %v89 = vld [vmem:[%s5 + $0x34] sm:$0xf]
  %v90 = vld [vmem:[%s5 + $0x38] sm:$0xf]
  %v91 = vld [vmem:[%s5 + $0x3c] sm:$0xf]
  %v92 = vld [vmem:[%s6] sm:$0x1]
  %v94 = vlaneseq
  %v95 = vshrl.u32 %v94, 7
  %v96 = vsub.s32 0, %v95
  %v97 = vrot.slane %v92, %v96
  %v115 = vunpack.c.l.b16 %v76
  %v116 = vunpack.c.l.b16 %v77
  %v117 = vunpack.c.l.b16 %v78
  %v118 = vunpack.c.l.b16 %v79
  %v119 = vunpack.c.l.b16 %v80
  %v120 = vunpack.c.l.b16 %v81
  %v121 = vunpack.c.l.b16 %v82
  %v122 = vunpack.c.l.b16 %v83
  %v123 = vunpack.c.l.b16 %v84
  %v124 = vunpack.c.l.b16 %v85
  %v125 = vunpack.c.l.b16 %v86
  %v126 = vunpack.c.l.b16 %v87
  %v127 = vunpack.c.l.b16 %v88
  %v128 = vunpack.c.l.b16 %v89
  %v129 = vunpack.c.l.b16 %v90
  %v130 = vunpack.c.l.b16 %v91
  %v131 = vpack.c.b16 %v116, %v115
  %v132 = vpack.c.b16 %v118, %v117
  %v133 = vpack.c.b16 %v120, %v119
  %v134 = vpack.c.b16 %v122, %v121
  %v135 = vpack.c.b16 %v124, %v123
  %v136 = vpack.c.b16 %v126, %v125
  %v137 = vpack.c.b16 %v128, %v127
  %v138 = vpack.c.b16 %v130, %v129
  %147 = vmatprep.subr.bf16.mxu0 0
  %148 = vmatpush1.bf16.msra.mxu0 %v131
  %149 = vmatprep.subr.bf16.mxu0 0
  %150 = vmatpush1.bf16.msra.mxu0 %v132
  %151 = vmatprep.subr.bf16.mxu0 0
  %152 = vmatpush1.bf16.msra.mxu0 %v133
  %153 = vmatprep.subr.bf16.mxu0 0
  %154 = vmatpush1.bf16.msra.mxu0 %v134
  %155 = vmatprep.subr.bf16.mxu0 0
  %156 = vmatpush1.bf16.msra.mxu0 %v135
  %157 = vmatprep.subr.bf16.mxu0 0
  %158 = vmatpush1.bf16.msra.mxu0 %v136
  %159 = vmatprep.subr.bf16.mxu0 0
  %160 = vmatpush1.bf16.msra.mxu0 %v137
  %161 = vmatprep.subr.bf16.mxu0 0
  %162 = vmatpush1.bf16.msra.mxu0 %v138
  %163 = vmatprep.subr.bf16.mxu0 0
  %164 = vmatpush1.bf16.msra.mxu0 0
  %165 = vmatprep.subr.bf16.mxu0 0
  %166 = vmatpush1.bf16.msra.mxu0 0
  %167 = vmatprep.subr.bf16.mxu0 0
  %168 = vmatpush1.bf16.msra.mxu0 0
  %169 = vmatprep.subr.bf16.mxu0 0
  %170 = vmatpush1.bf16.msra.mxu0 0
  %171 = vmatprep.subr.bf16.mxu0 0
  %172 = vmatpush1.bf16.msra.mxu0 0
  %173 = vmatprep.subr.bf16.mxu0 0
  %174 = vmatpush1.bf16.msra.mxu0 0
  %175 = vmatprep.subr.bf16.mxu0 0
  %176 = vmatpush1.bf16.msra.mxu0 0
  %177 = vmatprep.subr.bf16.mxu0 0
  %178 = vmatpush1.bf16.msra.mxu0 0
  %179 = vmatprep.mubr.bf16.mxu0 0
  %180 = vmatmul.mubr.bf16.gmra.mrb[0].mxu0 %v75
  %v181 = vpop.f32.mrb[0].mxu0
  %v182 = vadd.f32 %v97, %v181
  %v183 = vpop.f32.mrb[0].mxu0
  %v184 = vpop.f32.mrb[0].mxu0
  %v185 = vadd.f32 %v97, %v184
  %v186 = vpop.f32.mrb[0].mxu0
  %187 = vdwg.mxu0
  %188 = vst [vmem:[%s7] sm:$0xff] %v182
  %189 = vst [vmem:[%s7 + $0x8] sm:$0xff] %v185
  // Predicated region
  $region30: #{mlp_pallas.5} parent=0 // pred_check
    _
  $region31: #{mlp_pallas.5} parent=0 // pred_check_branch
    %191 = sbr.rel (0) target = $region33
  $region32: #{mlp_pallas.5} parent=0 // pred_region
    _
  $region33: #{mlp_pallas.5} parent=0 // pred_fallthru
    _
  // Predicated region
  $region34: #{mlp_pallas.5} parent=0 // pred_check
    _
  $region35: #{mlp_pallas.5} parent=0 // pred_check_branch
    %193 = sbr.rel (0) target = $region37
  $region36: #{mlp_pallas.5} parent=0 // pred_region
    _
  $region37: #{mlp_pallas.5} parent=0 // pred_fallthru
    _

</llo_original>
